<compile_context>
chip_gen: v7x
topology: tpu7x:2x2x1
jax: 0.10.0
libtpu: 0.0.40
codegen_flags: <defaults>
</compile_context>

<pallas_src>
import functools

import jax
import jax.numpy as jnp
from jax.experimental import pallas as pl
from jax.experimental.pallas import tpu as pltpu


def _round_up(n, m):
    return (n + m - 1) // m * m


def rbfkan_kernel(x_ref, ct_ref, cc_ref, w_rbf_ref, w_out_ref, o_ref, *,
                  alpha, input_dim, output_dim):
    """One batch tile of the fused RBFKAN forward.

    x_ref:     (TB, D)        input rows (f32)
    ct_ref:    (D, C_pad)     centers, pre-transposed, pad cols zero (f32)
    cc_ref:    (1, C_pad)     ||c||^2 per center (f32; used only for large D)
    w_rbf_ref: (C_pad, H_pad) RBF->hidden weights (pad rows zero)
    w_out_ref: (H_pad, O_pad) hidden->output weights (pad rows/cols zero)
    o_ref:     (TB, O)        exact-width output tile
    """
    x = x_ref[...].astype(jnp.float32)            # (TB, D)
    ct = ct_ref[...]                              # (D, C_pad) f32
    tb = x.shape[0]
    c_pad = ct.shape[1]

    if input_dim <= 32:
        # Exact pairwise squared distances via statically unrolled VPU FMAs:
        # cheaper than a degenerate K=D matmul for tiny D and numerically exact.
        d2 = jnp.zeros((tb, c_pad), jnp.float32)
        for d in range(input_dim):                # static unroll, D is tiny
            diff = x[:, d:d + 1] - ct[d:d + 1, :]            # (TB, C_pad)
            d2 = d2 + diff * diff
    else:
        # Large-D fallback: ||x||^2 + ||c||^2 - 2 x c^T on the MXU
        # (||c||^2 precomputed once outside the grid, not per tile).
        xx = jnp.sum(x * x, axis=-1, keepdims=True)                  # (TB, 1)
        xc = jnp.dot(x, ct, preferred_element_type=jnp.float32)      # (TB, C_pad)
        d2 = jnp.maximum(xx + cc_ref[...] - 2.0 * xc, 0.0)

    # multiquadratic_rbf(d) = sqrt(1 + (alpha*d)^2) = sqrt(1 + alpha^2 * d^2)
    basis = jnp.sqrt(1.0 + (alpha * alpha) * d2)                     # (TB, C_pad)

    # basis @ W_rbf  -> hidden (MXU, native-dtype operands, f32 accumulate).
    h = jnp.dot(basis.astype(w_rbf_ref.dtype), w_rbf_ref[...],
                preferred_element_type=jnp.float32)                  # (TB, H_pad)
    h = jnp.maximum(h, 0.0)                                          # ReLU

    out = jnp.dot(h.astype(w_out_ref.dtype), w_out_ref[...],
                  preferred_element_type=jnp.float32)                # (TB, O_pad)
    # Only the true output columns are written back to HBM.
    o_ref[...] = out[:, :output_dim].astype(o_ref.dtype)


def prepare_rbfkan_params(centers, w_rbf, w_out, compute_dtype=jnp.bfloat16):
    """One-time padding / layout of the static parameters (hoisted off the hot path).

    NOTE: any later parameter-update path must preserve the zero pad rows/cols,
    otherwise the padded lanes (whose basis values are nonzero) leak into the
    output.
    """
    C, D = centers.shape
    C2, H = w_rbf.shape
    H2, O = w_out.shape
    assert C2 == C and H2 == H

    C_pad = _round_up(C, 128)
    H_pad = _round_up(H, 128)
    O_pad = _round_up(O, 128)

    ct = jnp.zeros((D, C_pad), jnp.float32).at[:, :C].set(
        centers.astype(jnp.float32).T)                        # (D, C_pad)
    cc = jnp.sum(ct * ct, axis=0, keepdims=True)              # (1, C_pad)
    w_rbf_p = jnp.zeros((C_pad, H_pad), compute_dtype).at[:C, :H].set(
        w_rbf.astype(compute_dtype))
    w_out_p = jnp.zeros((H_pad, O_pad), compute_dtype).at[:H, :O].set(
        w_out.astype(compute_dtype))
    return ct, cc, w_rbf_p, w_out_p


@functools.partial(jax.jit,
                   static_argnames=("alpha", "output_dim", "batch_tile"))
def rbfkan_forward(x, ct, cc, w_rbf_p, w_out_p, *, alpha=1.0, output_dim=1,
                   batch_tile=2048):
    """Fused RBFKAN forward: x:(B,D); padded params from prepare_rbfkan_params."""
    B, D = x.shape
    C_pad = ct.shape[1]
    H_pad = w_rbf_p.shape[1]
    O_pad = w_out_p.shape[1]
    O = int(output_dim)

    # Batch tiling: stream TB-row tiles through VMEM (double-buffered by
    # Pallas); the ragged last tile is masked by Pallas, no wrapper padding.
    TB = min(int(batch_tile), _round_up(B, 8))
    grid = (pl.cdiv(B, TB),)

    kernel = functools.partial(rbfkan_kernel, alpha=float(alpha), input_dim=D,
                               output_dim=O)

    return pl.pallas_call(
        kernel,
        out_shape=jax.ShapeDtypeStruct((B, O), x.dtype),
        grid=grid,
        in_specs=[
            pl.BlockSpec((TB, D), lambda i: (i, 0)),          # x tiles stream
            pl.BlockSpec((D, C_pad), lambda i: (0, 0)),       # params stay resident
            pl.BlockSpec((1, C_pad), lambda i: (0, 0)),
            pl.BlockSpec((C_pad, H_pad), lambda i: (0, 0)),
            pl.BlockSpec((H_pad, O_pad), lambda i: (0, 0)),
        ],
        out_specs=pl.BlockSpec((TB, O), lambda i: (i, 0)),    # exact-width output
        compiler_params=pltpu.CompilerParams(
            dimension_semantics=("parallel",),
            vmem_limit_bytes=32 * 1024 * 1024,  # fits scoped VMEM on v5e/v6e/v7x
        ),
    )(x, ct, cc, w_rbf_p, w_out_p)


def _xavier_uniform(key, shape):
    # torch.nn.init.xavier_uniform_ for a 2-D tensor: bound = sqrt(6/(fan_in+fan_out)).
    fan_out, fan_in = shape
    bound = (6.0 / (fan_in + fan_out)) ** 0.5
    return jax.random.uniform(key, shape, jnp.float32, minval=-bound, maxval=bound)


def rbfkan_reference(x, centers, w_rbf, w_out, alpha=1.0):
    # Pure-JAX f32 reference mirroring the PyTorch forward exactly.
    d2 = jnp.sum((x[:, None, :] - centers[None, :, :]) ** 2, axis=-1)
    basis = jnp.sqrt(1.0 + (alpha * alpha) * d2)
    h = jnp.maximum(basis @ w_rbf, 0.0)
    return h @ w_out


if __name__ == "__main__":
    # Dims implied by RBFKAN(input_dim, hidden_dim, output_dim, num_centers).
    batch = 8
    input_dim = 4
    hidden_dim = 32
    output_dim = 3
    num_centers = 16
    alpha = 1.0

    key = jax.random.PRNGKey(0)
    k_x, k_c, k_w1, k_w2 = jax.random.split(key, 4)

    x = jax.random.normal(k_x, (batch, input_dim), jnp.float32)
    centers = _xavier_uniform(k_c, (num_centers, input_dim))      # (C, D)
    w_rbf = _xavier_uniform(k_w1, (num_centers, hidden_dim))      # (C, H)
    w_out = _xavier_uniform(k_w2, (hidden_dim, output_dim))       # (H, O)

    ref = rbfkan_reference(x, centers, w_rbf, w_out, alpha=alpha)

    # f32-parameter path: must match the exact reference tightly.
    params_f32 = prepare_rbfkan_params(centers, w_rbf, w_out,
                                       compute_dtype=jnp.float32)
    out_f32 = rbfkan_forward(x, *params_f32, alpha=alpha, output_dim=output_dim)
    out_f32 = jax.block_until_ready(out_f32)
    assert out_f32.shape == (batch, output_dim)
    assert jnp.allclose(out_f32, ref, atol=1e-4, rtol=1e-4), "f32 mismatch vs reference"

    # Default bf16-MXU-operand path: same math, bf16 matmul inputs, f32 accumulate.
    params_bf16 = prepare_rbfkan_params(centers, w_rbf, w_out,
                                        compute_dtype=jnp.bfloat16)
    out_bf16 = rbfkan_forward(x, *params_bf16, alpha=alpha, output_dim=output_dim)
    out_bf16 = jax.block_until_ready(out_bf16)
    assert out_bf16.shape == (batch, output_dim)
    assert jnp.allclose(out_bf16, ref, atol=5e-2, rtol=5e-2), "bf16 mismatch vs reference"

    print("KERNEL_OK")
</pallas_src>

<mosaic_0001>
module attributes {stable_mosaic.version = 11 : i64} {
  func.func @rbfkan_kernel(%arg0: i32, %arg1: memref<8x4xf32, #tpu.memory_space<vmem>>, %arg2: memref<4x128xf32, #tpu.memory_space<vmem>>, %arg3: memref<1x128xf32, #tpu.memory_space<vmem>>, %arg4: memref<128x128xf32, #tpu.memory_space<vmem>>, %arg5: memref<128x128xf32, #tpu.memory_space<vmem>>, %arg6: memref<8x3xf32, #tpu.memory_space<vmem>>) attributes {dimension_semantics = [#tpu.dimension_semantics<parallel>], iteration_bounds = array<i64: 1>, scalar_prefetch = 0 : i64, scratch_operands = 0 : i64, tpu.core_type = #tpu.core_type<tc>, window_params = [{transform_indices = @transform_0, window_bounds = array<i64: 8, 4>}, {pipeline_mode = #tpu.pipeline_mode<synchronous>, transform_indices = @transform_1, window_bounds = array<i64: 4, 128>}, {pipeline_mode = #tpu.pipeline_mode<synchronous>, transform_indices = @transform_2, window_bounds = array<i64: 1, 128>}, {pipeline_mode = #tpu.pipeline_mode<synchronous>, transform_indices = @transform_3, window_bounds = array<i64: 128, 128>}, {pipeline_mode = #tpu.pipeline_mode<synchronous>, transform_indices = @transform_4, window_bounds = array<i64: 128, 128>}, {transform_indices = @transform_5, window_bounds = array<i64: 8, 3>}]} {
    %c0 = arith.constant 0 : index
    %c0_0 = arith.constant 0 : index
    %0 = vector.load %arg1[%c0, %c0_0] : memref<8x4xf32, #tpu.memory_space<vmem>>, vector<8x4xf32>
    %c0_1 = arith.constant 0 : index
    %c0_2 = arith.constant 0 : index
    %1 = vector.load %arg2[%c0_1, %c0_2] : memref<4x128xf32, #tpu.memory_space<vmem>>, vector<4x128xf32>
    %cst = arith.constant 0.000000e+00 : f32
    %2 = vector.broadcast %cst : f32 to vector<8x128xf32>
    %3 = vector.extract_strided_slice %0 {offsets = [0, 0], sizes = [8, 1], strides = [1, 1]} : vector<8x4xf32> to vector<8x1xf32>
    %4 = vector.extract_strided_slice %1 {offsets = [0, 0], sizes = [1, 128], strides = [1, 1]} : vector<4x128xf32> to vector<1x128xf32>
    %5 = vector.broadcast %3 : vector<8x1xf32> to vector<8x128xf32>
    %6 = vector.broadcast %4 : vector<1x128xf32> to vector<8x128xf32>
    %7 = arith.subf %5, %6 : vector<8x128xf32>
    %8 = arith.mulf %7, %7 : vector<8x128xf32>
    %9 = arith.addf %2, %8 : vector<8x128xf32>
    %10 = vector.extract_strided_slice %0 {offsets = [0, 1], sizes = [8, 1], strides = [1, 1]} : vector<8x4xf32> to vector<8x1xf32>
    %11 = vector.extract_strided_slice %1 {offsets = [1, 0], sizes = [1, 128], strides = [1, 1]} : vector<4x128xf32> to vector<1x128xf32>
    %12 = vector.broadcast %10 : vector<8x1xf32> to vector<8x128xf32>
    %13 = vector.broadcast %11 : vector<1x128xf32> to vector<8x128xf32>
    %14 = arith.subf %12, %13 : vector<8x128xf32>
    %15 = arith.mulf %14, %14 : vector<8x128xf32>
    %16 = arith.addf %9, %15 : vector<8x128xf32>
    %17 = vector.extract_strided_slice %0 {offsets = [0, 2], sizes = [8, 1], strides = [1, 1]} : vector<8x4xf32> to vector<8x1xf32>
    %18 = vector.extract_strided_slice %1 {offsets = [2, 0], sizes = [1, 128], strides = [1, 1]} : vector<4x128xf32> to vector<1x128xf32>
    %19 = vector.broadcast %17 : vector<8x1xf32> to vector<8x128xf32>
    %20 = vector.broadcast %18 : vector<1x128xf32> to vector<8x128xf32>
    %21 = arith.subf %19, %20 : vector<8x128xf32>
    %22 = arith.mulf %21, %21 : vector<8x128xf32>
    %23 = arith.addf %16, %22 : vector<8x128xf32>
    %24 = vector.extract_strided_slice %0 {offsets = [0, 3], sizes = [8, 1], strides = [1, 1]} : vector<8x4xf32> to vector<8x1xf32>
    %25 = vector.extract_strided_slice %1 {offsets = [3, 0], sizes = [1, 128], strides = [1, 1]} : vector<4x128xf32> to vector<1x128xf32>
    %26 = vector.broadcast %24 : vector<8x1xf32> to vector<8x128xf32>
    %27 = vector.broadcast %25 : vector<1x128xf32> to vector<8x128xf32>
    %28 = arith.subf %26, %27 : vector<8x128xf32>
    %29 = arith.mulf %28, %28 : vector<8x128xf32>
    %30 = arith.addf %23, %29 : vector<8x128xf32>
    %cst_3 = arith.constant 1.000000e+00 : f32
    %31 = vector.broadcast %cst_3 : f32 to vector<8x128xf32>
    %32 = arith.mulf %31, %30 : vector<8x128xf32>
    %cst_4 = arith.constant 1.000000e+00 : f32
    %33 = vector.broadcast %cst_4 : f32 to vector<8x128xf32>
    %34 = arith.addf %33, %32 : vector<8x128xf32>
    %35 = math.sqrt %34 : vector<8x128xf32>
    %c0_5 = arith.constant 0 : index
    %c0_6 = arith.constant 0 : index
    %36 = vector.load %arg4[%c0_5, %c0_6] : memref<128x128xf32, #tpu.memory_space<vmem>>, vector<128x128xf32>
    %cst_7 = arith.constant dense<0.000000e+00> : vector<8x128xf32>
    %37 = tpu.matmul %35, %36, %cst_7 {dimension_numbers = #tpu.dot_dimension_numbers<[1], [0], [0], [1], [0, 0, 1, 1], [], []>} : vector<8x128xf32>, vector<128x128xf32>, vector<8x128xf32> -> vector<8x128xf32>
    %cst_8 = arith.constant 0.000000e+00 : f32
    %38 = vector.broadcast %cst_8 : f32 to vector<8x128xf32>
    %39 = arith.maximumf %37, %38 : vector<8x128xf32>
    %c0_9 = arith.constant 0 : index
    %c0_10 = arith.constant 0 : index
    %40 = vector.load %arg5[%c0_9, %c0_10] : memref<128x128xf32, #tpu.memory_space<vmem>>, vector<128x128xf32>
    %cst_11 = arith.constant dense<0.000000e+00> : vector<8x128xf32>
    %41 = tpu.matmul %39, %40, %cst_11 {dimension_numbers = #tpu.dot_dimension_numbers<[1], [0], [0], [1], [0, 0, 1, 1], [], []>} : vector<8x128xf32>, vector<128x128xf32>, vector<8x128xf32> -> vector<8x128xf32>
    %42 = vector.extract_strided_slice %41 {offsets = [0, 0], sizes = [8, 3], strides = [1, 1]} : vector<8x128xf32> to vector<8x3xf32>
    %c0_12 = arith.constant 0 : index
    %c0_13 = arith.constant 0 : index
    %43 = vector.load %arg6[%c0_12, %c0_13] : memref<8x3xf32, #tpu.memory_space<vmem>>, vector<8x3xf32>
    tpu.vector_store %arg6[%c0_12, %c0_13], %42 {strides = array<i32>} : memref<8x3xf32, #tpu.memory_space<vmem>>, vector<8x3xf32>,
    return
  }
  func.func @transform_0(%arg0: i32) -> (i32, i32) {
    %c0_i32 = arith.constant 0 : i32
    %c0_i32_0 = arith.constant 0 : i32
    return %arg0, %c0_i32 : i32, i32
  }
  func.func @transform_1(%arg0: i32) -> (i32, i32) {
    %c0_i32 = arith.constant 0 : i32
    %c0_i32_0 = arith.constant 0 : i32
    %c0_i32_1 = arith.constant 0 : i32
    return %c0_i32, %c0_i32_0 : i32, i32
  }
  func.func @transform_2(%arg0: i32) -> (i32, i32) {
    %c0_i32 = arith.constant 0 : i32
    %c0_i32_0 = arith.constant 0 : i32
    %c0_i32_1 = arith.constant 0 : i32
    return %c0_i32, %c0_i32_0 : i32, i32
  }
  func.func @transform_3(%arg0: i32) -> (i32, i32) {
    %c0_i32 = arith.constant 0 : i32
    %c0_i32_0 = arith.constant 0 : i32
    %c0_i32_1 = arith.constant 0 : i32
    return %c0_i32, %c0_i32_0 : i32, i32
  }
  func.func @transform_4(%arg0: i32) -> (i32, i32) {
    %c0_i32 = arith.constant 0 : i32
    %c0_i32_0 = arith.constant 0 : i32
    %c0_i32_1 = arith.constant 0 : i32
    return %c0_i32, %c0_i32_0 : i32, i32
  }
  func.func @transform_5(%arg0: i32) -> (i32, i32) {
    %c0_i32 = arith.constant 0 : i32
    %c0_i32_0 = arith.constant 0 : i32
    return %arg0, %c0_i32 : i32, i32
  }
}

</mosaic_0001>

<llo_original>
// kernel: rbfkan_forward.1
$region0: #{rbfkan_forward.1}
  #allocation0 [shape = 'u32[]', space=smem, size = 0x4, offset = 0x4, fixed_abs, tag = 'smem constant byte address 0x4 - core index']
  #allocation1 [shape = 'u32[144,128]{1,0:T(1,128)}', space=vmem, size = 0x12000, scoped, tag = 'internal scratch']
  %s0 = inlined_call_operand.vmem [shape: f32[8,4], index: 0, kind: input, shape index: {}]
  %s1 = inlined_call_operand.vmem [shape: f32[4,128], index: 1, kind: input, shape index: {}]
  %s2 = inlined_call_operand.vmem [shape: f32[1,128], index: 2, kind: input, shape index: {}]
  %s3 = inlined_call_operand.hbm [shape: f32[128,128], index: 3, kind: input, shape index: {}]
  %s4 = inlined_call_operand.hbm [shape: f32[128,128], index: 4, kind: input, shape index: {}]
  %s5 = inlined_call_operand.vmem [shape: f32[8,3], index: 5, kind: output, shape index: {}]
  %s6 = sld [smem:[#allocation0]]
  $region38: #{rbfkan_forward.1} parent=0
    _
  %s8 = ssub.s32 1, %s6
  %s9 = scalar_select 0, %s8, %s6
  $region1: #{rbfkan_forward.1} parent=0
    #allocation2 [shape = 'u8[65536]{0}', space=vmem, size = 0x10000, scoped, tag = 'input window, operand 3, single buffered']
    #allocation3 [shape = 's32[1]{0}', space=sflag, size = 0x4, scoped, tag = 'scoped memory for rbfkan_forward.1']
    #allocation4 [shape = 'u8[65536]{0}', space=vmem, size = 0x10000, scoped, tag = 'input window, operand 4, single buffered']
    #allocation5 [shape = 's32[1]{0}', space=sflag, size = 0x4, scoped, tag = 'scoped memory for rbfkan_forward.1']
    %10 = vsyncpa [#allocation3], 0
    %11 = vsyncpa [#allocation5], 0
    // Predicated region
    $region2: #{rbfkan_forward.1} parent=1 // pred_check
      _
    $region3: #{rbfkan_forward.1} parent=1 // pred_check_branch
      %13 = sbr.rel (0) target = $region5
    $region4: #{rbfkan_forward.1} parent=1 // pred_region
      _
    $region5: #{rbfkan_forward.1} parent=1 // pred_fallthru
      _
    // Predicated region
    $region6: #{rbfkan_forward.1} parent=1 // pred_check
      _
    $region7: #{rbfkan_forward.1} parent=1 // pred_check_branch
      %15 = sbr.rel (0) target = $region9
    $region8: #{rbfkan_forward.1} parent=1 // pred_region
      _
    $region9: #{rbfkan_forward.1} parent=1 // pred_fallthru
      _
    // Predicated region
    $region10: #{rbfkan_forward.1} parent=1 // pred_check
      _
    $region11: #{rbfkan_forward.1} parent=1 // pred_check_branch
      %17 = sbr.rel (0) target = $region13
    $region12: #{rbfkan_forward.1} parent=1 // pred_region
      _
    $region13: #{rbfkan_forward.1} parent=1 // pred_fallthru
      _
    // Predicated region
    $region14: #{rbfkan_forward.1} parent=1 // pred_check
      _
    $region15: #{rbfkan_forward.1} parent=1 // pred_check_branch
      %19 = sbr.rel (0) target = $region17
    $region16: #{rbfkan_forward.1} parent=1 // pred_region
      %s21 = ssub.s32 2048, 2048
      %22 = vsyncadd [#allocation3], %s21
      %s23 = sshll.u32 [#allocation2], 4
      %s24 = int_to_ptr.vmem [resolvable:$true] %s23
      %29 = dma.hbm_to_vmem [thread:$0]  %s3, 2048, %s24, [#allocation3], 128, 128, 8
    $region17: #{rbfkan_forward.1} parent=1 // pred_fallthru
      _
    // Predicated region
    $region18: #{rbfkan_forward.1} parent=1 // pred_check
      _
    $region19: #{rbfkan_forward.1} parent=1 // pred_check_branch
      %31 = sbr.rel (0) target = $region21
    $region20: #{rbfkan_forward.1} parent=1 // pred_region
      %s33 = ssub.s32 2048, 2048
      %34 = vsyncadd [#allocation5], %s33
      %s35 = sshll.u32 [#allocation4], 4
      %s36 = int_to_ptr.vmem [resolvable:$true] %s35
      %41 = dma.hbm_to_vmem [thread:$0]  %s4, 2048, %s36, [#allocation5], 128, 128, 8
    $region21: #{rbfkan_forward.1} parent=1 // pred_fallthru
      _
    // Predicated region
    $region22: #{rbfkan_forward.1} parent=1 // pred_check
      _
    $region23: #{rbfkan_forward.1} parent=1 // pred_check_branch
      %43 = sbr.rel (0) target = $region25
    $region24: #{rbfkan_forward.1} parent=1 // pred_region
      %44 = dma.done [#allocation3], 2048
    $region25: #{rbfkan_forward.1} parent=1 // pred_fallthru
      _
    // Predicated region
    $region26: #{rbfkan_forward.1} parent=1 // pred_check
      _
    $region27: #{rbfkan_forward.1} parent=1 // pred_check_branch
      %46 = sbr.rel (0) target = $region29
    $region28: #{rbfkan_forward.1} parent=1 // pred_region
      %47 = dma.done [#allocation5], 2048
    $region29: #{rbfkan_forward.1} parent=1 // pred_fallthru
      _
    %v48 = vld [vmem:[%s0] sm:$0xff]
    %v49 = vld [vmem:[%s1] sm:$0xf]
    %51 = vset.pattern.permute.xlu0 0
    %52 = vperm.xlu0 %51, %v48
    %v53 = vpop.permute.xlu0 %52
    %v55 = vlaneseq
    %v56 = vshrl.u32 %v55, 7
    %v57 = vsub.s32 0, %v56
    %v58 = vrot.slane %v49, %v57
    %v59 = vsub.f32 %v53, %v58
    %v60 = vmul.f32 %v59, %v59
    %v61 = vadd.f32 %v60, 0.0
    %62 = vset.pattern.permute.xlu0 1
    %63 = vperm.xlu0 %62, %v48
    %v64 = vpop.permute.xlu0 %63
    %v66 = vlaneseq
    %v67 = vshrl.u32 %v66, 7
    %v68 = vsub.s32 1, %v67
    %v69 = vrot.slane %v49, %v68
    %v70 = vsub.f32 %v64, %v69
    %v71 = vmul.f32 %v70, %v70
    %v72 = vadd.f32 %v61, %v71
    %73 = vset.pattern.permute.xlu0 2
    %74 = vperm.xlu0 %73, %v48
    %v75 = vpop.permute.xlu0 %74
    %v77 = vlaneseq
    %v78 = vshrl.u32 %v77, 7
    %v79 = vsub.s32 2, %v78
    %v80 = vrot.slane %v49, %v79
    %v81 = vsub.f32 %v75, %v80
    %v82 = vmul.f32 %v81, %v81
    %v83 = vadd.f32 %v72, %v82
    %84 = vset.pattern.permute.xlu0 3
    %85 = vperm.xlu0 %84, %v48
    %v86 = vpop.permute.xlu0 %85
    %v88 = vlaneseq
    %v89 = vshrl.u32 %v88, 7
    %v90 = vsub.s32 3, %v89
    %v91 = vrot.slane %v49, %v90
    %v92 = vsub.f32 %v86, %v91
    %v93 = vmul.f32 %v92, %v92
    %v94 = vadd.f32 %v83, %v93
    %v95 = vadd.f32 %v94, 1.0
    %v96 = vrsqrt.pop %v95
    %v97 = vmul.f32 %v95, %v96
    %vm98 = vcmp.eq.f32.partialorder %v95, inf
    %v99 = vsel %vm98, %v95, %v97
    %vm100 = vcmp.eq.f32.partialorder %v95, 0.0
    %v101 = vand.u32 %v95, 2147483648
    %v102 = vsel %vm100, %v101, %v99
    %v103 = vld [vmem:[#allocation2] sm:$0xff]
    %v104 = vld [vmem:[#allocation2 + $0x8] sm:$0xff]
    %v105 = vld [vmem:[#allocation2 + $0x10] sm:$0xff]
    %v106 = vld [vmem:[#allocation2 + $0x18] sm:$0xff]
    %v107 = vld [vmem:[#allocation2 + $0x20] sm:$0xff]
    %v108 = vld [vmem:[#allocation2 + $0x28] sm:$0xff]
    %v109 = vld [vmem:[#allocation2 + $0x30] sm:$0xff]
    %v110 = vld [vmem:[#allocation2 + $0x38] sm:$0xff]
    %v111 = vld [vmem:[#allocation2 + $0x40] sm:$0xff]
    %v112 = vld [vmem:[#allocation2 + $0x48] sm:$0xff]
    %v113 = vld [vmem:[#allocation2 + $0x50] sm:$0xff]
    %v114 = vld [vmem:[#allocation2 + $0x58] sm:$0xff]
    %v115 = vld [vmem:[#allocation2 + $0x60] sm:$0xff]
    %v116 = vld [vmem:[#allocation2 + $0x68] sm:$0xff]
    %v117 = vld [vmem:[#allocation2 + $0x70] sm:$0xff]
    %v118 = vld [vmem:[#allocation2 + $0x78] sm:$0xff]
    %119 = vmatprep.subr.mxu0 0.0
    %120 = vmatpush1.msra.mxu0 %v103
    %121 = vmatprep.subr.mxu0 0.0
    %122 = vmatpush1.msra.mxu0 %v104
    %123 = vmatprep.subr.mxu0 0.0
    %124 = vmatpush1.msra.mxu0 %v105
    %125 = vmatprep.subr.mxu0 0.0
    %126 = vmatpush1.msra.mxu0 %v106
    %127 = vmatprep.subr.mxu0 0.0
    %128 = vmatpush1.msra.mxu0 %v107
    %129 = vmatprep.subr.mxu0 0.0
    %130 = vmatpush1.msra.mxu0 %v108
    %131 = vmatprep.subr.mxu0 0.0
    %132 = vmatpush1.msra.mxu0 %v109
    %133 = vmatprep.subr.mxu0 0.0
    %134 = vmatpush1.msra.mxu0 %v110
    %135 = vmatprep.subr.mxu0 0.0
    %136 = vmatpush1.msra.mxu0 %v111
    %137 = vmatprep.subr.mxu0 0.0
    %138 = vmatpush1.msra.mxu0 %v112
    %139 = vmatprep.subr.mxu0 0.0
    %140 = vmatpush1.msra.mxu0 %v113
    %141 = vmatprep.subr.mxu0 0.0
    %142 = vmatpush1.msra.mxu0 %v114
    %143 = vmatprep.subr.mxu0 0.0
    %144 = vmatpush1.msra.mxu0 %v115
    %145 = vmatprep.subr.mxu0 0.0
    %146 = vmatpush1.msra.mxu0 %v116
    %147 = vmatprep.subr.mxu0 0.0
    %148 = vmatpush1.msra.mxu0 %v117
    %149 = vmatprep.subr.mxu0 0.0
    %150 = vmatpush1.msra.mxu0 %v118
    %151 = vmatprep.subr.mxu0 0.0
    %152 = vmatpush1.msra.mxu0 0.0
    %153 = vmatprep.subr.mxu0 0.0
    %154 = vmatpush1.msra.mxu0 0.0
    %155 = vmatprep.subr.mxu0 0.0
    %156 = vmatpush1.msra.mxu0 0.0
    %157 = vmatprep.subr.mxu0 0.0
    %158 = vmatpush1.msra.mxu0 0.0
    %159 = vmatprep.subr.mxu0 0.0
    %160 = vmatpush1.msra.mxu0 0.0
    %161 = vmatprep.subr.mxu0 0.0
    %162 = vmatpush1.msra.mxu0 0.0
    %163 = vmatprep.subr.mxu0 0.0
    %164 = vmatpush1.msra.mxu0 0.0
    %165 = vmatprep.subr.mxu0 0.0
    %166 = vmatpush1.msra.mxu0 0.0
    %167 = vmatprep.subr.mxu0 0.0
    %168 = vmatpush1.msra.mxu0 0.0
    %169 = vmatprep.subr.mxu0 0.0
    %170 = vmatpush1.msra.mxu0 0.0
    %171 = vmatprep.subr.mxu0 0.0
    %172 = vmatpush1.msra.mxu0 0.0
    %173 = vmatprep.subr.mxu0 0.0
    %174 = vmatpush1.msra.mxu0 0.0
    %175 = vmatprep.subr.mxu0 0.0
    %176 = vmatpush1.msra.mxu0 0.0
    %177 = vmatprep.subr.mxu0 0.0
    %178 = vmatpush1.msra.mxu0 0.0
    %179 = vmatprep.subr.mxu0 0.0
    %180 = vmatpush1.msra.mxu0 0.0
    %181 = vmatprep.subr.mxu0 0.0
    %182 = vmatpush1.msra.mxu0 0.0
    %183 = vmatprep.mubr.f32.mxu0 0.0
    %184 = vmatmul.mubr.f32.gmra.mrb[0].mxu0 %v102
    %v185 = vpop.f32.mrb[0].mxu0
    %v186 = vadd.f32 0.0, %v185
    %v187 = vpop.f32.mrb[0].mxu0
    %188 = vdwg.mxu0
    %v189 = vmax.f32 %v186, 0.0
    %v190 = vld [vmem:[#allocation4] sm:$0xff]
    %v191 = vld [vmem:[#allocation4 + $0x8] sm:$0xff]
    %v192 = vld [vmem:[#allocation4 + $0x10] sm:$0xff]
    %v193 = vld [vmem:[#allocation4 + $0x18] sm:$0xff]
    %v194 = vld [vmem:[#allocation4 + $0x20] sm:$0xff]
    %v195 = vld [vmem:[#allocation4 + $0x28] sm:$0xff]
    %v196 = vld [vmem:[#allocation4 + $0x30] sm:$0xff]
    %v197 = vld [vmem:[#allocation4 + $0x38] sm:$0xff]
    %v198 = vld [vmem:[#allocation4 + $0x40] sm:$0xff]
    %v199 = vld [vmem:[#allocation4 + $0x48] sm:$0xff]
    %v200 = vld [vmem:[#allocation4 + $0x50] sm:$0xff]
    %v201 = vld [vmem:[#allocation4 + $0x58] sm:$0xff]
    %v202 = vld [vmem:[#allocation4 + $0x60] sm:$0xff]
    %v203 = vld [vmem:[#allocation4 + $0x68] sm:$0xff]
    %v204 = vld [vmem:[#allocation4 + $0x70] sm:$0xff]
    %v205 = vld [vmem:[#allocation4 + $0x78] sm:$0xff]
    %206 = vmatprep.subr.mxu0 0.0
    %207 = vmatpush1.msra.mxu0 %v190
    %208 = vmatprep.subr.mxu0 0.0
    %209 = vmatpush1.msra.mxu0 %v191
    %210 = vmatprep.subr.mxu0 0.0
    %211 = vmatpush1.msra.mxu0 %v192
    %212 = vmatprep.subr.mxu0 0.0
    %213 = vmatpush1.msra.mxu0 %v193
    %214 = vmatprep.subr.mxu0 0.0
    %215 = vmatpush1.msra.mxu0 %v194
    %216 = vmatprep.subr.mxu0 0.0
    %217 = vmatpush1.msra.mxu0 %v195
    %218 = vmatprep.subr.mxu0 0.0
    %219 = vmatpush1.msra.mxu0 %v196
    %220 = vmatprep.subr.mxu0 0.0
    %221 = vmatpush1.msra.mxu0 %v197
    %222 = vmatprep.subr.mxu0 0.0
    %223 = vmatpush1.msra.mxu0 %v198
    %224 = vmatprep.subr.mxu0 0.0
    %225 = vmatpush1.msra.mxu0 %v199
    %226 = vmatprep.subr.mxu0 0.0
    %227 = vmatpush1.msra.mxu0 %v200
    %228 = vmatprep.subr.mxu0 0.0
    %229 = vmatpush1.msra.mxu0 %v201
    %230 = vmatprep.subr.mxu0 0.0
    %231 = vmatpush1.msra.mxu0 %v202
    %232 = vmatprep.subr.mxu0 0.0
    %233 = vmatpush1.msra.mxu0 %v203
    %234 = vmatprep.subr.mxu0 0.0
    %235 = vmatpush1.msra.mxu0 %v204
    %236 = vmatprep.subr.mxu0 0.0
    %237 = vmatpush1.msra.mxu0 %v205
    %238 = vmatprep.subr.mxu0 0.0
    %239 = vmatpush1.msra.mxu0 0.0
    %240 = vmatprep.subr.mxu0 0.0
    %241 = vmatpush1.msra.mxu0 0.0
    %242 = vmatprep.subr.mxu0 0.0
    %243 = vmatpush1.msra.mxu0 0.0
    %244 = vmatprep.subr.mxu0 0.0
    %245 = vmatpush1.msra.mxu0 0.0
    %246 = vmatprep.subr.mxu0 0.0
    %247 = vmatpush1.msra.mxu0 0.0
    %248 = vmatprep.subr.mxu0 0.0
    %249 = vmatpush1.msra.mxu0 0.0
    %250 = vmatprep.subr.mxu0 0.0
    %251 = vmatpush1.msra.mxu0 0.0
    %252 = vmatprep.subr.mxu0 0.0
    %253 = vmatpush1.msra.mxu0 0.0
    %254 = vmatprep.subr.mxu0 0.0
    %255 = vmatpush1.msra.mxu0 0.0
    %256 = vmatprep.subr.mxu0 0.0
    %257 = vmatpush1.msra.mxu0 0.0
    %258 = vmatprep.subr.mxu0 0.0
    %259 = vmatpush1.msra.mxu0 0.0
    %260 = vmatprep.subr.mxu0 0.0
    %261 = vmatpush1.msra.mxu0 0.0
    %262 = vmatprep.subr.mxu0 0.0
    %263 = vmatpush1.msra.mxu0 0.0
    %264 = vmatprep.subr.mxu0 0.0
    %265 = vmatpush1.msra.mxu0 0.0
    %266 = vmatprep.subr.mxu0 0.0
    %267 = vmatpush1.msra.mxu0 0.0
    %268 = vmatprep.subr.mxu0 0.0
    %269 = vmatpush1.msra.mxu0 0.0
    %270 = vmatprep.mubr.f32.mxu0 0.0
    %271 = vmatmul.mubr.f32.gmra.mrb[0].mxu0 %v189
    %v272 = vpop.f32.mrb[0].mxu0
    %v273 = vadd.f32 0.0, %v272
    %v274 = vpop.f32.mrb[0].mxu0
    %275 = vdwg.mxu0
    %vm276 = vcmask 23552
    %277 = vst.msk [vmem:[%s5] sm:$0xff] %vm276, %v273
    // Predicated region
    $region30: #{rbfkan_forward.1} parent=1 // pred_check
      _
    $region31: #{rbfkan_forward.1} parent=1 // pred_check_branch
      %279 = sbr.rel (0) target = $region33
    $region32: #{rbfkan_forward.1} parent=1 // pred_region
      _
    $region33: #{rbfkan_forward.1} parent=1 // pred_fallthru
      _
    // Predicated region
    $region34: #{rbfkan_forward.1} parent=1 // pred_check
      _
    $region35: #{rbfkan_forward.1} parent=1 // pred_check_branch
      %281 = sbr.rel (0) target = $region37
    $region36: #{rbfkan_forward.1} parent=1 // pred_region
      _
    $region37: #{rbfkan_forward.1} parent=1 // pred_fallthru
      _
    %282 = vsyncpa [#allocation3], 1
    %283 = vsyncpa [#allocation5], 1

</llo_original>
